<compile_context>
chip_gen: v7x
topology: tpu7x:2x2x1
jax: 0.10.0
libtpu: 0.0.40
codegen_flags: <defaults>
</compile_context>

<pallas_src>
import jax
import jax.numpy as jnp
from jax import lax
from jax.experimental import pallas as pl
from jax.experimental.pallas import tpu as pltpu

LANE = 128  # stored last dims are padded to >= LANE for unmasked stores


# --------------------------------------------------------------------------
# Kernel 1: "pre" stage -- feat_map linear (text) + input_proj 1x1-conv +
# per-sample GroupNorm (image).  Single pallas_call, single grid step.
# --------------------------------------------------------------------------

def make_pre_kernel(B, HW, D, G, eps=1e-5):
    cpg = D // G

    def kernel(txt_ref, fmw_ref, fmb_ref, src_ref, pw_ref, pb_ref,
               gamma_ref, beta_ref, enc_ref, proj_ref):
        # ---- text branch: feat_map linear (output lane-padded to LANE) ----
        enc_ref[...] = (jnp.dot(txt_ref[...], fmw_ref[...],
                                preferred_element_type=jnp.float32)
                        + fmb_ref[...])

        # ---- image branch: 1x1 conv == channel matmul, batch on lanes ----
        y = (jnp.dot(pw_ref[...], src_ref[...],
                     preferred_element_type=jnp.float32)
             + pb_ref[...])                                   # [D, B*HW]

        # ---- per-sample GroupNorm: VPU/XLU stats (no MXU).  Lane masks pick
        #      each sample's contiguous HW-lane span; B is small -> static
        #      unroll.  Mean / rstd are accumulated as per-lane fields so the
        #      affine normalization runs exactly once over [D, B*HW].  For
        #      real GroundingDINO feature maps (HW ~ 10k-20k, D=256) tile the
        #      B*HW axis in the grid (multiples of 128) so blocks fit v7x's
        #      64 MiB VMEM. ----
        lane = lax.broadcasted_iota(jnp.int32, (D, B * HW), 1)
        mean_lane = jnp.zeros_like(y)
        rstd_lane = jnp.zeros_like(y)
        cnt = float(cpg * HW)
        for b in range(B):
            m = (lane >= b * HW) & (lane < (b + 1) * HW)
            yb = jnp.where(m, y, 0.0)
            ch_sum = jnp.sum(yb, axis=1, keepdims=True)       # [D, 1]
            ch_sq = jnp.sum(yb * yb, axis=1, keepdims=True)   # [D, 1]
            if cpg == 1:
                g_sum, g_sq = ch_sum, ch_sq
            else:
                g_sum = jnp.sum(ch_sum.reshape(G, cpg), axis=1, keepdims=True)
                g_sq = jnp.sum(ch_sq.reshape(G, cpg), axis=1, keepdims=True)
            g_mean = g_sum / cnt
            g_var = jnp.maximum(g_sq / cnt - g_mean * g_mean, 0.0)  # clamp >=0
            g_rstd = lax.rsqrt(g_var + eps)
            if cpg == 1:
                mean_c, rstd_c = g_mean, g_rstd
            else:
                mean_c = jnp.broadcast_to(
                    g_mean.reshape(G, 1, 1), (G, cpg, 1)).reshape(D, 1)
                rstd_c = jnp.broadcast_to(
                    g_rstd.reshape(G, 1, 1), (G, cpg, 1)).reshape(D, 1)
            mean_lane = jnp.where(m, mean_c, mean_lane)
            rstd_lane = jnp.where(m, rstd_c, rstd_lane)
        # single affine-normalize pass over the whole lane-dense slab
        proj_ref[...] = ((y - mean_lane) * rstd_lane * gamma_ref[...]
                         + beta_ref[...])                     # [D, B*HW]

    return kernel


def pre_stage(txt_flat, fmw_pad, fmb_pad, src_cbhw, pw, pb, gamma, beta,
              *, B, HW, D, G):
    # txt_flat: [B*L, Dbert]; fmw_pad: [Dbert, LANE]; src_cbhw: [Cin, B*HW]
    ML = txt_flat.shape[0]
    Dpad = fmw_pad.shape[1]
    return pl.pallas_call(
        make_pre_kernel(B, HW, D, G),
        out_shape=(jax.ShapeDtypeStruct((ML, Dpad), jnp.float32),
                   jax.ShapeDtypeStruct((D, B * HW), jnp.float32)),
    )(txt_flat, fmw_pad, fmb_pad, src_cbhw, pw, pb, gamma, beta)


# --------------------------------------------------------------------------
# Kernel 2: "post" stage -- fused ContrastiveEmbed class heads (all NL
# decoder layers in one matmul) + shared bbox MLP head + inverse_sigmoid /
# sigmoid.  grid=(B,), one lane-dense step per batch element.
# --------------------------------------------------------------------------

def make_post_kernel(NL, Q, Tmax, P):
    def kernel(hs_ref, txt_ref, mask_ref, ref_ref,
               w1_ref, b1_ref, w2_ref, b2_ref, w3_ref, b3_ref,
               cls_ref, box_ref):
        hs = hs_ref[...]                                      # [NL, Q, D]
        D = hs.shape[-1]
        x = hs.reshape(NL * Q, D)                             # Q % 8 == 0 -> layout-safe

        # ---- ContrastiveEmbed: hs @ txt^T, masked_fill(-inf) ----
        txt = txt_ref[...]                                    # [Tmax, D]
        logits = lax.dot_general(x, txt, (((1,), (1,)), ((), ())),
                                 preferred_element_type=jnp.float32)   # [NL*Q, Tmax]
        m = mask_ref[...]                                     # [1, Tmax]
        logits = jnp.where(m > 0.5, logits, -jnp.inf)
        cls_ref[...] = logits.reshape(NL, Q, Tmax)

        # ---- bbox MLP (D -> D -> D -> 4, lane-padded to P) + inv_sigmoid ----
        h = jnp.maximum(jnp.dot(x, w1_ref[...],
                                preferred_element_type=jnp.float32) + b1_ref[...], 0.0)
        h = jnp.maximum(jnp.dot(h, w2_ref[...],
                                preferred_element_type=jnp.float32) + b2_ref[...], 0.0)
        delta = jnp.dot(h, w3_ref[...],
                        preferred_element_type=jnp.float32) + b3_ref[...]  # [NL*Q, P]
        r = jnp.clip(ref_ref[...].reshape(NL * Q, P), 0.0, 1.0)
        inv_sig = (jnp.log(jnp.maximum(r, 1e-3))
                   - jnp.log(jnp.maximum(1.0 - r, 1e-3)))
        box_ref[...] = jax.nn.sigmoid(delta + inv_sig).reshape(NL, Q, P)

    return kernel


def fused_heads(hs_b, txt_pad, mask_pad, ref_pad, w1, b1, w2, b2, w3p, b3p):
    # hs_b: [B, NL, Q, D]  txt_pad: [B, Tmax, D]  mask_pad: [B, 1, Tmax]
    # ref_pad: [B, NL, Q, P] (cols >= 4 padded with 0.5)
    B, NL, Q, D = hs_b.shape
    Tmax = txt_pad.shape[1]
    P = ref_pad.shape[-1]
    return pl.pallas_call(
        make_post_kernel(NL, Q, Tmax, P),
        out_shape=(jax.ShapeDtypeStruct((B, NL, Q, Tmax), jnp.float32),
                   jax.ShapeDtypeStruct((B, NL, Q, P), jnp.float32)),
        grid=(B,),
        in_specs=[
            pl.BlockSpec((None, NL, Q, D), lambda b: (b, 0, 0, 0)),
            pl.BlockSpec((None, Tmax, D), lambda b: (b, 0, 0)),
            pl.BlockSpec((None, 1, Tmax), lambda b: (b, 0, 0)),
            pl.BlockSpec((None, NL, Q, P), lambda b: (b, 0, 0, 0)),
            pl.BlockSpec((D, D), lambda b: (0, 0)),
            pl.BlockSpec((1, D), lambda b: (0, 0)),
            pl.BlockSpec((D, D), lambda b: (0, 0)),
            pl.BlockSpec((1, D), lambda b: (0, 0)),
            pl.BlockSpec((D, P), lambda b: (0, 0)),
            pl.BlockSpec((1, P), lambda b: (0, 0)),
        ],
        out_specs=(pl.BlockSpec((None, NL, Q, Tmax), lambda b: (b, 0, 0, 0)),
                   pl.BlockSpec((None, NL, Q, P), lambda b: (b, 0, 0, 0))),
        compiler_params=pltpu.CompilerParams(
            dimension_semantics=("parallel",)),   # 2 steps -> 1 per TC on v7x
    )(hs_b, txt_pad, mask_pad, ref_pad, w1, b1, w2, b2, w3p, b3p)


# --------------------------------------------------------------------------
# GroundingDINO model (small synthetic configuration)
# --------------------------------------------------------------------------

class GroundingDINOPallas:
    def __init__(self, *, hidden_dim=32, bert_hidden=16, vocab_size=64,
                 max_text_len=128, num_queries=8, num_decoder_layers=2,
                 backbone_channels=8, num_groups=32, seed=42):
        self.hidden_dim = hidden_dim
        self.bert_hidden = bert_hidden
        self.max_text_len = max_text_len
        self.num_queries = num_queries
        self.num_decoder_layers = num_decoder_layers
        self.backbone_channels = backbone_channels
        self.num_groups = num_groups

        ks = list(jax.random.split(jax.random.PRNGKey(seed), 10))
        f32 = jnp.float32

        # --- BERT stub embeddings ---  # TODO(synk): full BERT encoder not ported
        self.bert_tok_emb = 0.05 * jax.random.normal(ks[0], (vocab_size, bert_hidden), f32)
        self.bert_pos_emb = 0.05 * jax.random.normal(ks[1], (512, bert_hidden), f32)

        # --- feat_map: Linear(bert_hidden, hidden_dim), xavier weight, zero bias ---
        scale = (6.0 / (bert_hidden + hidden_dim)) ** 0.5
        self.feat_map_w = jax.random.uniform(ks[2], (bert_hidden, hidden_dim), f32,
                                             -scale, scale)
        self.feat_map_b = jnp.zeros((1, hidden_dim), f32)
        # lane-padded copies so the kernel's stored last dim is >= 128
        self.feat_map_w_pad = jnp.zeros((bert_hidden, LANE), f32).at[:, :hidden_dim].set(
            self.feat_map_w)
        self.feat_map_b_pad = jnp.zeros((1, LANE), f32).at[:, :hidden_dim].set(
            self.feat_map_b)

        # --- backbone stub projection ---  # TODO(synk): Swin/ResNet backbone not ported
        self.backbone_w = 0.1 * jax.random.normal(ks[3], (backbone_channels, 3), f32)

        # --- input_proj: Conv2d(Cb, D, 1) (xavier, zero bias) + GroupNorm(32, D) ---
        scale = (6.0 / (backbone_channels + hidden_dim)) ** 0.5
        self.proj_w = jax.random.uniform(ks[4], (hidden_dim, backbone_channels), f32,
                                         -scale, scale)
        self.proj_b = jnp.zeros((hidden_dim, 1), f32)
        self.gn_gamma = jnp.ones((hidden_dim, 1), f32)
        self.gn_beta = jnp.zeros((hidden_dim, 1), f32)

        # --- bbox_embed: MLP(D, D, 4, 3); last layer weights/bias init'd to 0 ---
        def xavier(key, fan_in, fan_out):
            s = (6.0 / (fan_in + fan_out)) ** 0.5
            return jax.random.uniform(key, (fan_in, fan_out), f32, -s, s)
        self.bb_w1 = xavier(ks[5], hidden_dim, hidden_dim)
        self.bb_b1 = jnp.zeros((1, hidden_dim), f32)
        self.bb_w2 = xavier(ks[6], hidden_dim, hidden_dim)
        self.bb_b2 = jnp.zeros((1, hidden_dim), f32)
        self.bb_w3 = jnp.zeros((hidden_dim, 4), f32)   # nn.init.constant_(..., 0)
        self.bb_b3 = jnp.zeros((1, 4), f32)
        # lane-padded copies (columns >= 4 unused, sliced off in the wrapper)
        self.bb_w3_pad = jnp.zeros((hidden_dim, LANE), f32).at[:, :4].set(self.bb_w3)
        self.bb_b3_pad = jnp.zeros((1, LANE), f32).at[:, :4].set(self.bb_b3)

    # ---------------- external-module stubs (plain JAX glue) ----------------

    def _bert_stub(self, input_ids, position_ids):
        # TODO(synk): real BERT encoder; deterministic embedding-sum stub instead.
        return self.bert_tok_emb[input_ids] + self.bert_pos_emb[position_ids]

    def _backbone_stub(self, samples):
        # TODO(synk): real backbone; 2x2 avg-pool + fixed channel projection stub.
        B = samples.shape[0]
        x3 = samples[:, :3]
        H2, W2 = x3.shape[2] // 2, x3.shape[3] // 2
        pooled = x3.reshape(B, 3, H2, 2, W2, 2).mean(axis=(3, 5))     # [B,3,H/2,W/2]
        src = jnp.einsum("bchw,kc->bkhw", pooled, self.backbone_w)    # [B,Cb,H/2,W/2]
        mask = samples[:, 3, ::2, ::2] > 0.0                          # [B,H/2,W/2]
        return src, mask

    def _position_embedding_stub(self, not_mask, D):
        # TODO(synk): PositionEmbeddingSineHW not ported; simple sine PE stub.
        y = jnp.cumsum(not_mask.astype(jnp.float32), axis=1)
        x = jnp.cumsum(not_mask.astype(jnp.float32), axis=2)
        dim_t = jnp.arange(D // 2, dtype=jnp.float32)
        dim_t = 100.0 ** (2.0 * (dim_t // 2) / (D // 2))
        pos_x = x[..., None] / dim_t
        pos_y = y[..., None] / dim_t
        pos = jnp.concatenate([jnp.sin(pos_x), jnp.sin(pos_y)], axis=-1)  # [B,H,W,D]
        return jnp.transpose(pos, (0, 3, 1, 2))                           # [B,D,H,W]

    def _transformer_stub(self, srcs_proj, pos, encoded_text):
        # TODO(synk): deformable encoder/decoder not ported; deterministic stub
        # producing hs (NL,B,Q,D) and reference (NL+1,B,Q,4) from the inputs.
        NL, Q, D = self.num_decoder_layers, self.num_queries, self.hidden_dim
        src_mean = srcs_proj.mean(axis=2)              # [B, D]
        pos_mean = pos.reshape(pos.shape[0], pos.shape[1], -1).mean(axis=2)  # [B, D]
        txt_mean = encoded_text.mean(axis=1)           # [B, D]
        q_phase = jnp.sin(jnp.arange(Q, dtype=jnp.float32))[None, :, None]
        base = jnp.tanh(src_mean[:, None, :] + 0.5 * txt_mean[:, None, :]
                        + 0.1 * pos_mean[:, None, :] + q_phase)        # [B, Q, D]
        hs = jnp.stack([base * (0.5 + 0.5 * l) for l in range(NL)])    # [NL,B,Q,D]
        reference = jnp.stack(
            [jax.nn.sigmoid(base[..., :4] + 0.1 * l) for l in range(NL + 1)])
        hs_enc = None
        ref_enc = None
        init_box_proposal = None
        return hs, reference, hs_enc, ref_enc, init_box_proposal

    # ------------------------------- forward --------------------------------

    def forward(self, samples, input_ids, attention_mask, position_ids,
                token_type_ids, text_self_attention_masks):
        B, L = input_ids.shape
        D, Tmax = self.hidden_dim, self.max_text_len
        NL, Q = self.num_decoder_layers, self.num_queries
        G = self.num_groups

        # ---- stubs feeding the fused "pre" kernel ----
        last_hidden = self._bert_stub(input_ids, position_ids)        # [B, L, Dbert]
        src, mask = self._backbone_stub(samples)                      # NCHW
        Bc, Cb, Hf, Wf = src.shape
        HW = Hf * Wf

        # layout: fold batch into the lane axis -> (Cin, B*HW), lane-dense
        src_cbhw = jnp.transpose(src.reshape(Bc, Cb, HW), (1, 0, 2)).reshape(
            Cb, Bc * HW).astype(jnp.float32)
        txt_flat = last_hidden.reshape(B * L, self.bert_hidden).astype(jnp.float32)

        # ---- fused Pallas call #1: feat_map + input_proj(1x1 conv + GroupNorm) ----
        enc_pad, proj = pre_stage(txt_flat, self.feat_map_w_pad, self.feat_map_b_pad,
                                  src_cbhw, self.proj_w, self.proj_b,
                                  self.gn_gamma, self.gn_beta,
                                  B=Bc, HW=HW, D=D, G=G)
        encoded_text = enc_pad[:, :D].reshape(B, L, D)                 # [B, L, D]
        proj_flat = jnp.transpose(proj.reshape(D, Bc, HW), (1, 0, 2))  # [B, D, HW]
        text_token_mask = attention_mask.astype(bool)                  # [B, L]

        # ---- position embedding (stub) ----
        pos = self._position_embedding_stub(~mask, D)                  # [B, D, H, W]

        # ---- transformer (stub); dn_number == 0 -> no CDN path ----
        hs, reference, hs_enc, ref_enc, _ = self._transformer_stub(
            proj_flat, pos, encoded_text)

        # ---- fused Pallas call #2: ContrastiveEmbed class heads (all NL layers)
        #      + shared bbox MLP head + inverse_sigmoid/sigmoid ----
        hs_b = jnp.transpose(hs, (1, 0, 2, 3))                         # [B, NL, Q, D]
        ref_b = jnp.transpose(reference[:-1], (1, 0, 2, 3))            # [B, NL, Q, 4]
        # pad ref columns >= 4 with 0.5 (inverse_sigmoid(0.5) == 0); sliced off later
        ref_pad = jnp.full((B, NL, Q, LANE), 0.5, jnp.float32).at[..., :4].set(ref_b)
        txt_pad = jnp.zeros((B, Tmax, D), jnp.float32).at[:, :L].set(encoded_text)
        mask_pad = jnp.zeros((B, 1, Tmax), jnp.float32).at[:, 0, :L].set(
            attention_mask.astype(jnp.float32))

        cls_b, box_b = fused_heads(hs_b, txt_pad, mask_pad, ref_pad,
                                   self.bb_w1, self.bb_b1, self.bb_w2, self.bb_b2,
                                   self.bb_w3_pad, self.bb_b3_pad)
        outputs_class = jnp.transpose(cls_b, (1, 0, 2, 3))             # [NL,B,Q,Tmax]
        outputs_coord = jnp.transpose(box_b[..., :4], (1, 0, 2, 3))    # [NL,B,Q,4]

        out = {
            "pred_logits": outputs_class[-1],
            "pred_boxes": outputs_coord[-1],
        }
        text_mask = jnp.zeros((B, Tmax), bool).at[:, :L].set(text_token_mask)
        out["text_mask"] = text_mask
        # hs_enc is None (two_stage_type == 'no') -> no interm_outputs.
        return out


# --------------------------------------------------------------------------
# main
# --------------------------------------------------------------------------

if __name__ == "__main__":
    key = jax.random.PRNGKey(0)
    k1, k2, k3 = jax.random.split(key, 3)

    B, H, W = 2, 16, 16
    L = 8

    model = GroundingDINOPallas()

    # samples: [B, 4, H, W] -- 3 image channels + 1 padding-mask channel (NCHW)
    img = jax.random.normal(k1, (B, 3, H, W), jnp.float32)
    pad_mask = (jax.random.uniform(k2, (B, 1, H, W)) > 0.2).astype(jnp.float32)
    samples = jnp.concatenate([img, pad_mask], axis=1)

    input_ids = jax.random.randint(k3, (B, L), 0, 64)
    attention_mask = jnp.ones((B, L), jnp.int32)
    position_ids = jnp.broadcast_to(jnp.arange(L), (B, L))
    token_type_ids = jnp.zeros((B, L), jnp.int32)
    text_self_attention_masks = jnp.ones((B, L, L), bool)

    out = model.forward(samples, input_ids, attention_mask, position_ids,
                        token_type_ids, text_self_attention_masks)

    jax.block_until_ready(out["pred_logits"])
    jax.block_until_ready(out["pred_boxes"])

    assert out["pred_logits"].shape == (B, model.num_queries, model.max_text_len)
    assert out["pred_boxes"].shape == (B, model.num_queries, 4)
    assert bool(jnp.all(jnp.isfinite(out["pred_boxes"])))
    print("KERNEL_OK")
</pallas_src>

<mosaic_0001>
module attributes {stable_mosaic.version = 11 : i64} {
  func.func @kernel(%arg0: memref<16x16xf32, #tpu.memory_space<vmem>>, %arg1: memref<16x128xf32, #tpu.memory_space<vmem>>, %arg2: memref<1x128xf32, #tpu.memory_space<vmem>>, %arg3: memref<8x128xf32, #tpu.memory_space<vmem>>, %arg4: memref<32x8xf32, #tpu.memory_space<vmem>>, %arg5: memref<32x1xf32, #tpu.memory_space<vmem>>, %arg6: memref<32x1xf32, #tpu.memory_space<vmem>>, %arg7: memref<32x1xf32, #tpu.memory_space<vmem>>, %arg8: memref<16x128xf32, #tpu.memory_space<vmem>>, %arg9: memref<32x128xf32, #tpu.memory_space<vmem>>) attributes {dimension_semantics = [], scalar_prefetch = 0 : i64, scratch_operands = 0 : i64, tpu.core_type = #tpu.core_type<tc>} {
    %c0 = arith.constant 0 : index
    %c0_0 = arith.constant 0 : index
    %0 = vector.load %arg0[%c0, %c0_0] : memref<16x16xf32, #tpu.memory_space<vmem>>, vector<16x16xf32>
    %c0_1 = arith.constant 0 : index
    %c0_2 = arith.constant 0 : index
    %1 = vector.load %arg1[%c0_1, %c0_2] : memref<16x128xf32, #tpu.memory_space<vmem>>, vector<16x128xf32>
    %cst = arith.constant dense<0.000000e+00> : vector<16x128xf32>
    %2 = tpu.matmul %0, %1, %cst {dimension_numbers = #tpu.dot_dimension_numbers<[1], [0], [0], [1], [0, 0, 1, 1], [], []>} : vector<16x16xf32>, vector<16x128xf32>, vector<16x128xf32> -> vector<16x128xf32>
    %c0_3 = arith.constant 0 : index
    %c0_4 = arith.constant 0 : index
    %3 = vector.load %arg2[%c0_3, %c0_4] : memref<1x128xf32, #tpu.memory_space<vmem>>, vector<1x128xf32>
    %4 = vector.broadcast %3 : vector<1x128xf32> to vector<16x128xf32>
    %5 = arith.addf %2, %4 : vector<16x128xf32>
    %c0_5 = arith.constant 0 : index
    %c0_6 = arith.constant 0 : index
    %6 = vector.load %arg8[%c0_5, %c0_6] : memref<16x128xf32, #tpu.memory_space<vmem>>, vector<16x128xf32>
    tpu.vector_store %arg8[%c0_5, %c0_6], %5 {strides = array<i32>} : memref<16x128xf32, #tpu.memory_space<vmem>>, vector<16x128xf32>,
    %c0_7 = arith.constant 0 : index
    %c0_8 = arith.constant 0 : index
    %7 = vector.load %arg4[%c0_7, %c0_8] : memref<32x8xf32, #tpu.memory_space<vmem>>, vector<32x8xf32>
    %c0_9 = arith.constant 0 : index
    %c0_10 = arith.constant 0 : index
    %8 = vector.load %arg3[%c0_9, %c0_10] : memref<8x128xf32, #tpu.memory_space<vmem>>, vector<8x128xf32>
    %cst_11 = arith.constant dense<0.000000e+00> : vector<32x128xf32>
    %9 = tpu.matmul %7, %8, %cst_11 {dimension_numbers = #tpu.dot_dimension_numbers<[1], [0], [0], [1], [0, 0, 1, 1], [], []>} : vector<32x8xf32>, vector<8x128xf32>, vector<32x128xf32> -> vector<32x128xf32>
    %c0_12 = arith.constant 0 : index
    %c0_13 = arith.constant 0 : index
    %10 = vector.load %arg5[%c0_12, %c0_13] : memref<32x1xf32, #tpu.memory_space<vmem>>, vector<32x1xf32>
    %11 = vector.broadcast %10 : vector<32x1xf32> to vector<32x128xf32>
    %12 = arith.addf %9, %11 : vector<32x128xf32>
    %13 = tpu.iota {dimensions = array<i32: 1>} : vector<32x128xi32>
    %cst_14 = arith.constant 0.000000e+00 : f32
    %14 = vector.broadcast %cst_14 : f32 to vector<32x128xf32>
    %cst_15 = arith.constant 0.000000e+00 : f32
    %15 = vector.broadcast %cst_15 : f32 to vector<32x128xf32>
    %c0_i32 = arith.constant 0 : i32
    %16 = vector.broadcast %c0_i32 : i32 to vector<32x128xi32>
    %17 = arith.cmpi sge, %13, %16 : vector<32x128xi32>
    %c64_i32 = arith.constant 64 : i32
    %18 = vector.broadcast %c64_i32 : i32 to vector<32x128xi32>
    %19 = arith.cmpi slt, %13, %18 : vector<32x128xi32>
    %20 = arith.andi %17, %19 : vector<32x128xi1>
    %cst_16 = arith.constant 0.000000e+00 : f32
    %21 = vector.broadcast %cst_16 : f32 to vector<32x128xf32>
    %22 = arith.select %20, %12, %21 : vector<32x128xi1>, vector<32x128xf32>
    %cst_17 = arith.constant dense<0.000000e+00> : vector<32xf32>
    %23 = vector.multi_reduction <add>, %22, %cst_17 [1] : vector<32x128xf32> to vector<32xf32>
    %24 = vector.shape_cast %23 : vector<32xf32> to vector<32x1xf32>
    %25 = arith.mulf %22, %22 : vector<32x128xf32>
    %cst_18 = arith.constant dense<0.000000e+00> : vector<32xf32>
    %26 = vector.multi_reduction <add>, %25, %cst_18 [1] : vector<32x128xf32> to vector<32xf32>
    %27 = vector.shape_cast %26 : vector<32xf32> to vector<32x1xf32>
    %cst_19 = arith.constant 6.400000e+01 : f32
    %28 = vector.broadcast %cst_19 : f32 to vector<32x1xf32>
    %29 = arith.divf %24, %28 : vector<32x1xf32>
    %cst_20 = arith.constant 6.400000e+01 : f32
    %30 = vector.broadcast %cst_20 : f32 to vector<32x1xf32>
    %31 = arith.divf %27, %30 : vector<32x1xf32>
    %32 = arith.mulf %29, %29 : vector<32x1xf32>
    %33 = arith.subf %31, %32 : vector<32x1xf32>
    %cst_21 = arith.constant 0.000000e+00 : f32
    %34 = vector.broadcast %cst_21 : f32 to vector<32x1xf32>
    %35 = arith.maximumf %33, %34 : vector<32x1xf32>
    %cst_22 = arith.constant 9.99999974E-6 : f32
    %36 = vector.broadcast %cst_22 : f32 to vector<32x1xf32>
    %37 = arith.addf %35, %36 : vector<32x1xf32>
    %38 = math.rsqrt %37 : vector<32x1xf32>
    %39 = vector.shape_cast %29 : vector<32x1xf32> to vector<32x1xf32>
    %40 = vector.broadcast %39 : vector<32x1xf32> to vector<32x128xf32>
    %41 = arith.select %20, %40, %14 : vector<32x128xi1>, vector<32x128xf32>
    %42 = vector.shape_cast %38 : vector<32x1xf32> to vector<32x1xf32>
    %43 = vector.broadcast %42 : vector<32x1xf32> to vector<32x128xf32>
    %44 = arith.select %20, %43, %15 : vector<32x128xi1>, vector<32x128xf32>
    %c64_i32_23 = arith.constant 64 : i32
    %45 = vector.broadcast %c64_i32_23 : i32 to vector<32x128xi32>
    %46 = arith.cmpi sge, %13, %45 : vector<32x128xi32>
    %c128_i32 = arith.constant 128 : i32
    %47 = vector.broadcast %c128_i32 : i32 to vector<32x128xi32>
    %48 = arith.cmpi slt, %13, %47 : vector<32x128xi32>
    %49 = arith.andi %46, %48 : vector<32x128xi1>
    %cst_24 = arith.constant 0.000000e+00 : f32
    %50 = vector.broadcast %cst_24 : f32 to vector<32x128xf32>
    %51 = arith.select %49, %12, %50 : vector<32x128xi1>, vector<32x128xf32>
    %cst_25 = arith.constant dense<0.000000e+00> : vector<32xf32>
    %52 = vector.multi_reduction <add>, %51, %cst_25 [1] : vector<32x128xf32> to vector<32xf32>
    %53 = vector.shape_cast %52 : vector<32xf32> to vector<32x1xf32>
    %54 = arith.mulf %51, %51 : vector<32x128xf32>
    %cst_26 = arith.constant dense<0.000000e+00> : vector<32xf32>
    %55 = vector.multi_reduction <add>, %54, %cst_26 [1] : vector<32x128xf32> to vector<32xf32>
    %56 = vector.shape_cast %55 : vector<32xf32> to vector<32x1xf32>
    %cst_27 = arith.constant 6.400000e+01 : f32
    %57 = vector.broadcast %cst_27 : f32 to vector<32x1xf32>
    %58 = arith.divf %53, %57 : vector<32x1xf32>
    %cst_28 = arith.constant 6.400000e+01 : f32
    %59 = vector.broadcast %cst_28 : f32 to vector<32x1xf32>
    %60 = arith.divf %56, %59 : vector<32x1xf32>
    %61 = arith.mulf %58, %58 : vector<32x1xf32>
    %62 = arith.subf %60, %61 : vector<32x1xf32>
    %cst_29 = arith.constant 0.000000e+00 : f32
    %63 = vector.broadcast %cst_29 : f32 to vector<32x1xf32>
    %64 = arith.maximumf %62, %63 : vector<32x1xf32>
    %cst_30 = arith.constant 9.99999974E-6 : f32
    %65 = vector.broadcast %cst_30 : f32 to vector<32x1xf32>
    %66 = arith.addf %64, %65 : vector<32x1xf32>
    %67 = math.rsqrt %66 : vector<32x1xf32>
    %68 = vector.shape_cast %58 : vector<32x1xf32> to vector<32x1xf32>
    %69 = vector.broadcast %68 : vector<32x1xf32> to vector<32x128xf32>
    %70 = arith.select %49, %69, %41 : vector<32x128xi1>, vector<32x128xf32>
    %71 = vector.shape_cast %67 : vector<32x1xf32> to vector<32x1xf32>
    %72 = vector.broadcast %71 : vector<32x1xf32> to vector<32x128xf32>
    %73 = arith.select %49, %72, %44 : vector<32x128xi1>, vector<32x128xf32>
    %74 = arith.subf %12, %70 : vector<32x128xf32>
    %75 = arith.mulf %74, %73 : vector<32x128xf32>
    %c0_31 = arith.constant 0 : index
    %c0_32 = arith.constant 0 : index
    %76 = vector.load %arg6[%c0_31, %c0_32] : memref<32x1xf32, #tpu.memory_space<vmem>>, vector<32x1xf32>
    %77 = vector.broadcast %76 : vector<32x1xf32> to vector<32x128xf32>
    %78 = arith.mulf %75, %77 : vector<32x128xf32>
    %c0_33 = arith.constant 0 : index
    %c0_34 = arith.constant 0 : index
    %79 = vector.load %arg7[%c0_33, %c0_34] : memref<32x1xf32, #tpu.memory_space<vmem>>, vector<32x1xf32>
    %80 = vector.broadcast %79 : vector<32x1xf32> to vector<32x128xf32>
    %81 = arith.addf %78, %80 : vector<32x128xf32>
    %c0_35 = arith.constant 0 : index
    %c0_36 = arith.constant 0 : index
    %82 = vector.load %arg9[%c0_35, %c0_36] : memref<32x128xf32, #tpu.memory_space<vmem>>, vector<32x128xf32>
    tpu.vector_store %arg9[%c0_35, %c0_36], %81 {strides = array<i32>} : memref<32x128xf32, #tpu.memory_space<vmem>>, vector<32x128xf32>,
    return
  }
}

</mosaic_0001>

<llo_original>
// kernel: tpu_custom_call.1
$region0: #{tpu_custom_call.1}
  #allocation0 [shape = 'u32[]', space=smem, size = 0x4, offset = 0x4, fixed_abs, tag = 'smem constant byte address 0x4 - core index']
  #allocation1 [shape = 'u32[144,128]{1,0:T(1,128)}', space=vmem, size = 0x12000, scoped, tag = 'internal scratch']
  %s0 = inlined_call_operand.vmem [shape: f32[16,16], index: 0, kind: input, shape index: {}]
  %s1 = inlined_call_operand.vmem [shape: f32[16,128], index: 1, kind: input, shape index: {}]
  %s2 = inlined_call_operand.vmem [shape: f32[1,128], index: 2, kind: input, shape index: {}]
  %s3 = inlined_call_operand.vmem [shape: f32[8,128], index: 3, kind: input, shape index: {}]
  %s4 = inlined_call_operand.vmem [shape: f32[32,8], index: 4, kind: input, shape index: {}]
  %s5 = inlined_call_operand.vmem [shape: f32[32,1], index: 5, kind: input, shape index: {}]
  %s6 = inlined_call_operand.vmem [shape: f32[32,1], index: 6, kind: input, shape index: {}]
  %s7 = inlined_call_operand.vmem [shape: f32[32,1], index: 7, kind: input, shape index: {}]
  %s8 = inlined_call_operand.hbm [shape: f32[16,128], index: 8, kind: output, shape index: {0}]
  %s9 = inlined_call_operand.hbm [shape: f32[32,128], index: 9, kind: output, shape index: {1}]
  %10 = xla_tuple %s8, %s9
  %s11 = sld [smem:[#allocation0]]
  $region50: #{tpu_custom_call.1} parent=0
    _
  %s13 = ssub.s32 1, %s11
  %s14 = scalar_select 0, %s13, %s11
  $region1: #{tpu_custom_call.1} parent=0
    #allocation2 [shape = 'u8[8192]{0}', space=vmem, size = 0x2000, scoped, tag = 'output window, operand 0, single buffered']
    #allocation3 [shape = 's32[1]{0}', space=sflag, size = 0x4, scoped, tag = 'scoped memory for tpu_custom_call.1']
    #allocation4 [shape = 'u8[16384]{0}', space=vmem, size = 0x4000, scoped, tag = 'output window, operand 1, single buffered']
    #allocation5 [shape = 's32[1]{0}', space=sflag, size = 0x4, scoped, tag = 'scoped memory for tpu_custom_call.1']
    %15 = vsyncpa [#allocation3], 0
    %16 = vsyncpa [#allocation5], 0
    // Predicated region
    $region2: #{tpu_custom_call.1} parent=1 // pred_check
      _
    $region3: #{tpu_custom_call.1} parent=1 // pred_check_branch
      %18 = sbr.rel (0) target = $region5
    $region4: #{tpu_custom_call.1} parent=1 // pred_region
      _
    $region5: #{tpu_custom_call.1} parent=1 // pred_fallthru
      _
    // Predicated region
    $region6: #{tpu_custom_call.1} parent=1 // pred_check
      _
    $region7: #{tpu_custom_call.1} parent=1 // pred_check_branch
      %20 = sbr.rel (0) target = $region9
    $region8: #{tpu_custom_call.1} parent=1 // pred_region
      _
    $region9: #{tpu_custom_call.1} parent=1 // pred_fallthru
      _
    // Predicated region
    $region10: #{tpu_custom_call.1} parent=1 // pred_check
      _
    $region11: #{tpu_custom_call.1} parent=1 // pred_check_branch
      %22 = sbr.rel (0) target = $region13
    $region12: #{tpu_custom_call.1} parent=1 // pred_region
      _
    $region13: #{tpu_custom_call.1} parent=1 // pred_fallthru
      _
    // Predicated region
    $region14: #{tpu_custom_call.1} parent=1 // pred_check
      _
    $region15: #{tpu_custom_call.1} parent=1 // pred_check_branch
      %24 = sbr.rel (0) target = $region17
    $region16: #{tpu_custom_call.1} parent=1 // pred_region
      _
    $region17: #{tpu_custom_call.1} parent=1 // pred_fallthru
      _
    // Predicated region
    $region18: #{tpu_custom_call.1} parent=1 // pred_check
      _
    $region19: #{tpu_custom_call.1} parent=1 // pred_check_branch
      %26 = sbr.rel (0) target = $region21
    $region20: #{tpu_custom_call.1} parent=1 // pred_region
      _
    $region21: #{tpu_custom_call.1} parent=1 // pred_fallthru
      _
    // Predicated region
    $region22: #{tpu_custom_call.1} parent=1 // pred_check
      _
    $region23: #{tpu_custom_call.1} parent=1 // pred_check_branch
      %28 = sbr.rel (0) target = $region25
    $region24: #{tpu_custom_call.1} parent=1 // pred_region
      _
    $region25: #{tpu_custom_call.1} parent=1 // pred_fallthru
      _
    // Predicated region
    $region26: #{tpu_custom_call.1} parent=1 // pred_check
      _
    $region27: #{tpu_custom_call.1} parent=1 // pred_check_branch
      %30 = sbr.rel (0) target = $region29
    $region28: #{tpu_custom_call.1} parent=1 // pred_region
      _
    $region29: #{tpu_custom_call.1} parent=1 // pred_fallthru
      _
    // Predicated region
    $region30: #{tpu_custom_call.1} parent=1 // pred_check
      _
    $region31: #{tpu_custom_call.1} parent=1 // pred_check_branch
      %32 = sbr.rel (0) target = $region33
    $region32: #{tpu_custom_call.1} parent=1 // pred_region
      _
    $region33: #{tpu_custom_call.1} parent=1 // pred_fallthru
      _
    %v33 = vld [vmem:[%s0] sm:$0xff]
    %v34 = vld [vmem:[%s0 + $0x8] sm:$0xff]
    %v35 = vld [vmem:[%s1] sm:$0xff]
    %v36 = vld [vmem:[%s1 + $0x8] sm:$0xff]
    %v37 = vld [vmem:[%s2] sm:$0x1]
    %v39 = vlaneseq
    %v40 = vshrl.u32 %v39, 7
    %v41 = vsub.s32 0, %v40
    %v42 = vrot.slane %v37, %v41
    %vm44 = vcmask 130048
    %v46 = vsel %vm44, %v33, 0
    %v49 = vsel %vm44, %v34, 0
    %51 = vmatprep.subr.mxu0 0.0
    %52 = vmatpush1.msra.mxu0 %v35
    %53 = vmatprep.subr.mxu0 0.0
    %54 = vmatpush1.msra.mxu0 %v36
    %55 = vmatprep.subr.mxu0 0.0
    %56 = vmatpush1.msra.mxu0 0.0
    %57 = vmatprep.subr.mxu0 0.0
    %58 = vmatpush1.msra.mxu0 0.0
    %59 = vmatprep.subr.mxu0 0.0
    %60 = vmatpush1.msra.mxu0 0.0
    %61 = vmatprep.subr.mxu0 0.0
    %62 = vmatpush1.msra.mxu0 0.0
    %63 = vmatprep.subr.mxu0 0.0
    %64 = vmatpush1.msra.mxu0 0.0
    %65 = vmatprep.subr.mxu0 0.0
    %66 = vmatpush1.msra.mxu0 0.0
    %67 = vmatprep.subr.mxu0 0.0
    %68 = vmatpush1.msra.mxu0 0.0
    %69 = vmatprep.subr.mxu0 0.0
    %70 = vmatpush1.msra.mxu0 0.0
    %71 = vmatprep.subr.mxu0 0.0
    %72 = vmatpush1.msra.mxu0 0.0
    %73 = vmatprep.subr.mxu0 0.0
    %74 = vmatpush1.msra.mxu0 0.0
    %75 = vmatprep.subr.mxu0 0.0
    %76 = vmatpush1.msra.mxu0 0.0
    %77 = vmatprep.subr.mxu0 0.0
    %78 = vmatpush1.msra.mxu0 0.0
    %79 = vmatprep.subr.mxu0 0.0
    %80 = vmatpush1.msra.mxu0 0.0
    %81 = vmatprep.subr.mxu0 0.0
    %82 = vmatpush1.msra.mxu0 0.0
    %83 = vmatprep.subr.mxu0 0.0
    %84 = vmatpush1.msra.mxu0 0.0
    %85 = vmatprep.subr.mxu0 0.0
    %86 = vmatpush1.msra.mxu0 0.0
    %87 = vmatprep.subr.mxu0 0.0
    %88 = vmatpush1.msra.mxu0 0.0
    %89 = vmatprep.subr.mxu0 0.0
    %90 = vmatpush1.msra.mxu0 0.0
    %91 = vmatprep.subr.mxu0 0.0
    %92 = vmatpush1.msra.mxu0 0.0
    %93 = vmatprep.subr.mxu0 0.0
    %94 = vmatpush1.msra.mxu0 0.0
    %95 = vmatprep.subr.mxu0 0.0
    %96 = vmatpush1.msra.mxu0 0.0
    %97 = vmatprep.subr.mxu0 0.0
    %98 = vmatpush1.msra.mxu0 0.0
    %99 = vmatprep.subr.mxu0 0.0
    %100 = vmatpush1.msra.mxu0 0.0
    %101 = vmatprep.subr.mxu0 0.0
    %102 = vmatpush1.msra.mxu0 0.0
    %103 = vmatprep.subr.mxu0 0.0
    %104 = vmatpush1.msra.mxu0 0.0
    %105 = vmatprep.subr.mxu0 0.0
    %106 = vmatpush1.msra.mxu0 0.0
    %107 = vmatprep.subr.mxu0 0.0
    %108 = vmatpush1.msra.mxu0 0.0
    %109 = vmatprep.subr.mxu0 0.0
    %110 = vmatpush1.msra.mxu0 0.0
    %111 = vmatprep.subr.mxu0 0.0
    %112 = vmatpush1.msra.mxu0 0.0
    %113 = vmatprep.subr.mxu0 0.0
    %114 = vmatpush1.msra.mxu0 0.0
    %115 = vmatprep.mubr.f32.mxu0 0.0
    %116 = vmatmul.mubr.f32.gmra.mrb[0].mxu0 %v46
    %v117 = vpop.f32.mrb[0].mxu0
    %v118 = vadd.f32 %v42, %v117
    %v119 = vpop.f32.mrb[0].mxu0
    %120 = vmatprep.mubr.f32.mxu0 0.0
    %121 = vmatmul.mubr.f32.gmra.mrb[0].mxu0 %v49
    %v122 = vpop.f32.mrb[0].mxu0
    %v123 = vadd.f32 %v42, %v122
    %v124 = vpop.f32.mrb[0].mxu0
    %125 = vdwg.mxu0
    %126 = vst [vmem:[#allocation2] sm:$0xff] %v118
    %127 = vst [vmem:[#allocation2 + $0x8] sm:$0xff] %v123
    %v128 = vld [vmem:[%s4] sm:$0xff]
    %v129 = vld [vmem:[%s4 + $0x8] sm:$0xff]
    %v130 = vld [vmem:[%s4 + $0x10] sm:$0xff]
    %v131 = vld [vmem:[%s4 + $0x18] sm:$0xff]
    %v132 = vld [vmem:[%s3] sm:$0xff]
    %v133 = vld [vmem:[%s5] sm:$0xff]
    %v134 = vld [vmem:[%s5 + $0x8] sm:$0xff]
    %v135 = vld [vmem:[%s5 + $0x10] sm:$0xff]
    %v136 = vld [vmem:[%s5 + $0x18] sm:$0xff]
    %138 = vset.pattern.permute.xlu0 0
    %139 = vperm.xlu0 %138, %v133
    %v140 = vpop.permute.xlu0 %139
    %143 = vset.pattern.permute.xlu0 0
    %144 = vperm.xlu0 %143, %v134
    %v145 = vpop.permute.xlu0 %144
    %148 = vset.pattern.permute.xlu0 0
    %149 = vperm.xlu0 %148, %v135
    %v150 = vpop.permute.xlu0 %149
    %153 = vset.pattern.permute.xlu0 0
    %154 = vperm.xlu0 %153, %v136
    %v155 = vpop.permute.xlu0 %154
    %vm157 = vcmask 64512
    %v159 = vsel %vm157, %v128, 0
    %v162 = vsel %vm157, %v129, 0
    %v165 = vsel %vm157, %v130, 0
    %v168 = vsel %vm157, %v131, 0
    %170 = vmatprep.subr.mxu0 0.0
    %171 = vmatpush1.msra.mxu0 %v132
    %172 = vmatprep.subr.mxu0 0.0
    %173 = vmatpush1.msra.mxu0 0.0
    %174 = vmatprep.subr.mxu0 0.0
    %175 = vmatpush1.msra.mxu0 0.0
    %176 = vmatprep.subr.mxu0 0.0
    %177 = vmatpush1.msra.mxu0 0.0
    %178 = vmatprep.subr.mxu0 0.0
    %179 = vmatpush1.msra.mxu0 0.0
    %180 = vmatprep.subr.mxu0 0.0
    %181 = vmatpush1.msra.mxu0 0.0
    %182 = vmatprep.subr.mxu0 0.0
    %183 = vmatpush1.msra.mxu0 0.0
    %184 = vmatprep.subr.mxu0 0.0
    %185 = vmatpush1.msra.mxu0 0.0
    %186 = vmatprep.subr.mxu0 0.0
    %187 = vmatpush1.msra.mxu0 0.0
    %188 = vmatprep.subr.mxu0 0.0
    %189 = vmatpush1.msra.mxu0 0.0
    %190 = vmatprep.subr.mxu0 0.0
    %191 = vmatpush1.msra.mxu0 0.0
    %192 = vmatprep.subr.mxu0 0.0
    %193 = vmatpush1.msra.mxu0 0.0
    %194 = vmatprep.subr.mxu0 0.0
    %195 = vmatpush1.msra.mxu0 0.0
    %196 = vmatprep.subr.mxu0 0.0
    %197 = vmatpush1.msra.mxu0 0.0
    %198 = vmatprep.subr.mxu0 0.0
    %199 = vmatpush1.msra.mxu0 0.0
    %200 = vmatprep.subr.mxu0 0.0
    %201 = vmatpush1.msra.mxu0 0.0
    %202 = vmatprep.subr.mxu0 0.0
    %203 = vmatpush1.msra.mxu0 0.0
    %204 = vmatprep.subr.mxu0 0.0
    %205 = vmatpush1.msra.mxu0 0.0
    %206 = vmatprep.subr.mxu0 0.0
    %207 = vmatpush1.msra.mxu0 0.0
    %208 = vmatprep.subr.mxu0 0.0
    %209 = vmatpush1.msra.mxu0 0.0
    %210 = vmatprep.subr.mxu0 0.0
    %211 = vmatpush1.msra.mxu0 0.0
    %212 = vmatprep.subr.mxu0 0.0
    %213 = vmatpush1.msra.mxu0 0.0
    %214 = vmatprep.subr.mxu0 0.0
    %215 = vmatpush1.msra.mxu0 0.0
    %216 = vmatprep.subr.mxu0 0.0
    %217 = vmatpush1.msra.mxu0 0.0
    %218 = vmatprep.subr.mxu0 0.0
    %219 = vmatpush1.msra.mxu0 0.0
    %220 = vmatprep.subr.mxu0 0.0
    %221 = vmatpush1.msra.mxu0 0.0
    %222 = vmatprep.subr.mxu0 0.0
    %223 = vmatpush1.msra.mxu0 0.0
    %224 = vmatprep.subr.mxu0 0.0
    %225 = vmatpush1.msra.mxu0 0.0
    %226 = vmatprep.subr.mxu0 0.0
    %227 = vmatpush1.msra.mxu0 0.0
    %228 = vmatprep.subr.mxu0 0.0
    %229 = vmatpush1.msra.mxu0 0.0
    %230 = vmatprep.subr.mxu0 0.0
    %231 = vmatpush1.msra.mxu0 0.0
    %232 = vmatprep.subr.mxu0 0.0
    %233 = vmatpush1.msra.mxu0 0.0
    %234 = vmatprep.mubr.f32.mxu0 0.0
    %235 = vmatmul.mubr.f32.gmra.mrb[0].mxu0 %v159
    %v236 = vpop.f32.mrb[0].mxu0
    %v237 = vadd.f32 %v140, %v236
    %v238 = vpop.f32.mrb[0].mxu0
    %239 = vmatprep.mubr.f32.mxu0 0.0
    %240 = vmatmul.mubr.f32.gmra.mrb[0].mxu0 %v162
    %v241 = vpop.f32.mrb[0].mxu0
    %v242 = vadd.f32 %v145, %v241
    %v243 = vpop.f32.mrb[0].mxu0
    %244 = vmatprep.mubr.f32.mxu0 0.0
    %245 = vmatmul.mubr.f32.gmra.mrb[0].mxu0 %v165
    %v246 = vpop.f32.mrb[0].mxu0
    %v247 = vadd.f32 %v150, %v246
    %v248 = vpop.f32.mrb[0].mxu0
    %249 = vmatprep.mubr.f32.mxu0 0.0
    %250 = vmatmul.mubr.f32.gmra.mrb[0].mxu0 %v168
    %v251 = vpop.f32.mrb[0].mxu0
    %v252 = vadd.f32 %v155, %v251
    %v253 = vpop.f32.mrb[0].mxu0
    %254 = vdwg.mxu0
    %v255 = vlaneseq
    %v256 = vand.u32 %v255, 127
    %vm257 = vcmp.ge.s32.totalorder %v256, 0
    %vm258 = vcmp.lt.s32.totalorder %v256, 64
    %vm259 = vmand %vm257, %vm258
    %v260 = vsel %vm259, %v237, 0.0
    %v261 = vsel %vm259, %v242, 0.0
    %v262 = vsel %vm259, %v247, 0.0
    %v263 = vsel %vm259, %v252, 0.0
    %264 = vadd.xlane.f32.xlu0 %v260
    %v265 = vpop.xlane.xlu0 %264
    %266 = vadd.xlane.f32.xlu0 %v261
    %v267 = vpop.xlane.xlu0 %266
    %268 = vadd.xlane.f32.xlu0 %v262
    %v269 = vpop.xlane.xlu0 %268
    %270 = vadd.xlane.f32.xlu0 %v263
    %v271 = vpop.xlane.xlu0 %270
    %v272 = vmul.f32 %v260, %v260
    %v273 = vmul.f32 %v261, %v261
    %v274 = vmul.f32 %v262, %v262
    %v275 = vmul.f32 %v263, %v263
    %276 = vadd.xlane.f32.xlu0 %v272
    %v277 = vpop.xlane.xlu0 %276
    %278 = vadd.xlane.f32.xlu0 %v273
    %v279 = vpop.xlane.xlu0 %278
    %280 = vadd.xlane.f32.xlu0 %v274
    %v281 = vpop.xlane.xlu0 %280
    %282 = vadd.xlane.f32.xlu0 %v275
    %v283 = vpop.xlane.xlu0 %282
    %v284 = vrcp.pop 64.0
    %v285 = vmul.f32 %v265, %v284
    %v286 = vmul.f32 %v267, %v284
    %v287 = vmul.f32 %v269, %v284
    %v288 = vmul.f32 %v271, %v284
    %v289 = vmul.f32 %v277, %v284
    %v290 = vmul.f32 %v279, %v284
    %v291 = vmul.f32 %v281, %v284
    %v292 = vmul.f32 %v283, %v284
    %v293 = vmul.f32 %v285, %v285
    %v294 = vmul.f32 %v286, %v286
    %v295 = vmul.f32 %v287, %v287
    %v296 = vmul.f32 %v288, %v288
    %v297 = vsub.f32 %v289, %v293
    %v298 = vsub.f32 %v290, %v294
    %v299 = vsub.f32 %v291, %v295
    %v300 = vsub.f32 %v292, %v296
    %v301 = vmax.f32 %v297, 0.0
    %v302 = vmax.f32 %v298, 0.0
    %v303 = vmax.f32 %v299, 0.0
    %v304 = vmax.f32 %v300, 0.0
    %v305 = vadd.f32 %v301, 1e-05
    %v306 = vadd.f32 %v302, 1e-05
    %v307 = vadd.f32 %v303, 1e-05
    %v308 = vadd.f32 %v304, 1e-05
    %v309 = vrsqrt.pop %v305
    %v310 = vrsqrt.pop %v306
    %v311 = vrsqrt.pop %v307
    %v312 = vrsqrt.pop %v308
    %v313 = vsel %vm259, %v285, 0.0
    %v314 = vsel %vm259, %v286, 0.0
    %v315 = vsel %vm259, %v287, 0.0
    %v316 = vsel %vm259, %v288, 0.0
    %v317 = vsel %vm259, %v309, 0.0
    %v318 = vsel %vm259, %v310, 0.0
    %v319 = vsel %vm259, %v311, 0.0
    %v320 = vsel %vm259, %v312, 0.0
    %vm321 = vcmp.ge.s32.totalorder %v256, 64
    %vm322 = vcmp.lt.s32.totalorder %v256, 128
    %vm323 = vmand %vm321, %vm322
    %v324 = vsel %vm323, %v237, 0.0
    %v325 = vsel %vm323, %v242, 0.0
    %v326 = vsel %vm323, %v247, 0.0
    %v327 = vsel %vm323, %v252, 0.0
    %328 = vadd.xlane.f32.xlu0 %v324
    %v329 = vpop.xlane.xlu0 %328
    %330 = vadd.xlane.f32.xlu0 %v325
    %v331 = vpop.xlane.xlu0 %330
    %332 = vadd.xlane.f32.xlu0 %v326
    %v333 = vpop.xlane.xlu0 %332
    %334 = vadd.xlane.f32.xlu0 %v327
    %v335 = vpop.xlane.xlu0 %334
    %v336 = vmul.f32 %v324, %v324
    %v337 = vmul.f32 %v325, %v325
    %v338 = vmul.f32 %v326, %v326
    %v339 = vmul.f32 %v327, %v327
    %340 = vadd.xlane.f32.xlu0 %v336
    %v341 = vpop.xlane.xlu0 %340
    %342 = vadd.xlane.f32.xlu0 %v337
    %v343 = vpop.xlane.xlu0 %342
    %344 = vadd.xlane.f32.xlu0 %v338
    %v345 = vpop.xlane.xlu0 %344
    %346 = vadd.xlane.f32.xlu0 %v339
    %v347 = vpop.xlane.xlu0 %346
    %v348 = vmul.f32 %v329, %v284
    %v349 = vmul.f32 %v331, %v284
    %v350 = vmul.f32 %v333, %v284
    %v351 = vmul.f32 %v335, %v284
    %v352 = vmul.f32 %v341, %v284
    %v353 = vmul.f32 %v343, %v284
    %v354 = vmul.f32 %v345, %v284
    %v355 = vmul.f32 %v347, %v284
    %v356 = vmul.f32 %v348, %v348
    %v357 = vmul.f32 %v349, %v349
    %v358 = vmul.f32 %v350, %v350
    %v359 = vmul.f32 %v351, %v351
    %v360 = vsub.f32 %v352, %v356
    %v361 = vsub.f32 %v353, %v357
    %v362 = vsub.f32 %v354, %v358
    %v363 = vsub.f32 %v355, %v359
    %v364 = vmax.f32 %v360, 0.0
    %v365 = vmax.f32 %v361, 0.0
    %v366 = vmax.f32 %v362, 0.0
    %v367 = vmax.f32 %v363, 0.0
    %v368 = vadd.f32 %v364, 1e-05
    %v369 = vadd.f32 %v365, 1e-05
    %v370 = vadd.f32 %v366, 1e-05
    %v371 = vadd.f32 %v367, 1e-05
    %v372 = vrsqrt.pop %v368
    %v373 = vrsqrt.pop %v369
    %v374 = vrsqrt.pop %v370
    %v375 = vrsqrt.pop %v371
    %v376 = vsel %vm323, %v348, %v313
    %v377 = vsel %vm323, %v349, %v314
    %v378 = vsel %vm323, %v350, %v315
    %v379 = vsel %vm323, %v351, %v316
    %v380 = vsel %vm323, %v372, %v317
    %v381 = vsel %vm323, %v373, %v318
    %v382 = vsel %vm323, %v374, %v319
    %v383 = vsel %vm323, %v375, %v320
    %v384 = vsub.f32 %v237, %v376
    %v385 = vsub.f32 %v242, %v377
    %v386 = vsub.f32 %v247, %v378
    %v387 = vsub.f32 %v252, %v379
    %v388 = vmul.f32 %v384, %v380
    %v389 = vmul.f32 %v385, %v381
    %v390 = vmul.f32 %v386, %v382
    %v391 = vmul.f32 %v387, %v383
    %v392 = vld [vmem:[%s6] sm:$0xff]
    %v393 = vld [vmem:[%s6 + $0x8] sm:$0xff]
    %v394 = vld [vmem:[%s6 + $0x10] sm:$0xff]
    %v395 = vld [vmem:[%s6 + $0x18] sm:$0xff]
    %397 = vset.pattern.permute.xlu0 0
    %398 = vperm.xlu0 %397, %v392
    %v399 = vpop.permute.xlu0 %398
    %402 = vset.pattern.permute.xlu0 0
    %403 = vperm.xlu0 %402, %v393
    %v404 = vpop.permute.xlu0 %403
    %407 = vset.pattern.permute.xlu0 0
    %408 = vperm.xlu0 %407, %v394
    %v409 = vpop.permute.xlu0 %408
    %412 = vset.pattern.permute.xlu0 0
    %413 = vperm.xlu0 %412, %v395
    %v414 = vpop.permute.xlu0 %413
    %v416 = vmul.f32 %v388, %v399
    %v417 = vmul.f32 %v389, %v404
    %v418 = vmul.f32 %v390, %v409
    %v419 = vmul.f32 %v391, %v414
    %v420 = vld [vmem:[%s7] sm:$0xff]
    %v421 = vld [vmem:[%s7 + $0x8] sm:$0xff]
    %v422 = vld [vmem:[%s7 + $0x10] sm:$0xff]
    %v423 = vld [vmem:[%s7 + $0x18] sm:$0xff]
    %425 = vset.pattern.permute.xlu0 0
    %426 = vperm.xlu0 %425, %v420
    %v427 = vpop.permute.xlu0 %426
    %430 = vset.pattern.permute.xlu0 0
    %431 = vperm.xlu0 %430, %v421
    %v432 = vpop.permute.xlu0 %431
    %435 = vset.pattern.permute.xlu0 0
    %436 = vperm.xlu0 %435, %v422
    %v437 = vpop.permute.xlu0 %436
    %440 = vset.pattern.permute.xlu0 0
    %441 = vperm.xlu0 %440, %v423
    %v442 = vpop.permute.xlu0 %441
    %v444 = vadd.f32 %v416, %v427
    %v445 = vadd.f32 %v417, %v432
    %v446 = vadd.f32 %v418, %v437
    %v447 = vadd.f32 %v419, %v442
    %448 = vst [vmem:[#allocation4] sm:$0xff] %v444
    %449 = vst [vmem:[#allocation4 + $0x8] sm:$0xff] %v445
    %450 = vst [vmem:[#allocation4 + $0x10] sm:$0xff] %v446
    %451 = vst [vmem:[#allocation4 + $0x18] sm:$0xff] %v447
    // Predicated region
    $region34: #{tpu_custom_call.1} parent=1 // pred_check
      _
    $region35: #{tpu_custom_call.1} parent=1 // pred_check_branch
      %453 = sbr.rel (0) target = $region37
    $region36: #{tpu_custom_call.1} parent=1 // pred_region
      %s455 = ssub.s32 256, 256
      %456 = vsyncadd [#allocation3], %s455
      %s457 = sshll.u32 [#allocation2], 4
      %s458 = int_to_ptr.vmem [resolvable:$true] %s457
      %463 = dma.vmem_to_hbm [thread:$0]  %s458, 256, %s8, [#allocation3], 128, 128, 8
    $region37: #{tpu_custom_call.1} parent=1 // pred_fallthru
      _
    // Predicated region
    $region38: #{tpu_custom_call.1} parent=1 // pred_check
      _
    $region39: #{tpu_custom_call.1} parent=1 // pred_check_branch
      %465 = sbr.rel (0) target = $region41
    $region40: #{tpu_custom_call.1} parent=1 // pred_region
      %s467 = ssub.s32 512, 512
      %468 = vsyncadd [#allocation5], %s467
      %s469 = sshll.u32 [#allocation4], 4
      %s470 = int_to_ptr.vmem [resolvable:$true] %s469
      %475 = dma.vmem_to_hbm [thread:$0]  %s470, 512, %s9, [#allocation5], 128, 128, 8
    $region41: #{tpu_custom_call.1} parent=1 // pred_fallthru
      _
    // Predicated region
    $region42: #{tpu_custom_call.1} parent=1 // pred_check
      _
    $region43: #{tpu_custom_call.1} parent=1 // pred_check_branch
      %477 = sbr.rel (0) target = $region45
    $region44: #{tpu_custom_call.1} parent=1 // pred_region
      %478 = dma.done [#allocation3], 256
    $region45: #{tpu_custom_call.1} parent=1 // pred_fallthru
      _
    // Predicated region
    $region46: #{tpu_custom_call.1} parent=1 // pred_check
      _
    $region47: #{tpu_custom_call.1} parent=1 // pred_check_branch
      %480 = sbr.rel (0) target = $region49
    $region48: #{tpu_custom_call.1} parent=1 // pred_region
      %481 = dma.done [#allocation5], 512
    $region49: #{tpu_custom_call.1} parent=1 // pred_fallthru
      _
    %482 = vsyncpa [#allocation3], 1
    %483 = vsyncpa [#allocation5], 1

</llo_original>
